<compile_context>
chip_gen: v5e
topology: v5e:2x2
jax: 0.10.0
libtpu: 0.0.40
codegen_flags: <defaults>
</compile_context>

<pallas_src>
import functools

import jax
import jax.numpy as jnp
from jax.experimental import pallas as pl
from jax.experimental.pallas import tpu as pltpu

_LANES = 128
_MAX_BLOCK_ROWS = 2048   # 2048 * 128 * 4 B = 1 MiB per f32 input buffer


def _wmse_partial_kernel(p_ref, l_ref, o_ref, *, weight_balance, pos_weight,
                         valid_rows, block_rows, need_mask):
    """Writes the (8,128) partial sum of weighted squared errors for one block."""
    p = p_ref[...].astype(jnp.float32)
    l = l_ref[...].astype(jnp.float32)

    # sigmoid(x) == 0.5 * (tanh(0.5 * x) + 1): one EUP op + VPU fma.
    s = 0.5 * (jnp.tanh(0.5 * p) + 1.0)
    d = s - l
    loss = d * d                                    # MSELoss(reduction='none')
    if weight_balance:
        # weights = labels.clone(); weights[weights == 0] = pos_weight
        w = jnp.where(l == 0.0, jnp.float32(pos_weight), l)
        loss = loss * w

    if need_mask:
        # The last block may overrun the array; its out-of-bounds contents are
        # unspecified (possibly NaN), so select the garbage away.
        i = pl.program_id(0)
        row_ids = i * block_rows + jax.lax.broadcasted_iota(
            jnp.int32, loss.shape, 0)
        loss = jnp.where(row_ids < valid_rows, loss, 0.0)

    # VPU-only partial reduction to a single (8, 128) vreg: no per-step
    # cross-lane/sublane (XLU) reduce and no scalar read-modify-write chain.
    partial = loss.reshape(block_rows // 8, 8, _LANES).sum(axis=0)
    o_ref[...] = partial


def weighted_mse_loss(preds, labels, weight_balance=False, pos_weight=1.0):
    assert preds.shape == labels.shape
    n_elems = preds.size

    if not jnp.issubdtype(labels.dtype, jnp.floating):
        labels = labels.astype(jnp.float32)
    if not jnp.issubdtype(preds.dtype, jnp.floating):
        preds = preds.astype(jnp.float32)

    # Stream inputs in their native dtype; reshape(-1) of contiguous data is free.
    p_flat = preds.reshape(-1)
    l_flat = labels.reshape(-1)

    # Only pad when the element count isn't lane-divisible (common DL shapes
    # are).  Pad values are loss-neutral: (sigmoid(0) - 0.5)^2 == 0.
    rem = n_elems % _LANES
    if rem:
        pad = _LANES - rem
        p_flat = jnp.pad(p_flat, (0, pad),
                         constant_values=jnp.array(0.0, dtype=p_flat.dtype))
        l_flat = jnp.pad(l_flat, (0, pad),
                         constant_values=jnp.array(0.5, dtype=l_flat.dtype))

    rows = p_flat.size // _LANES
    p2 = p_flat.reshape(rows, _LANES)
    l2 = l_flat.reshape(rows, _LANES)

    # Large blocks (multiple of 8 rows), capped so the double-buffered input
    # footprint stays a few MiB (safe for v7x's smaller scoped VMEM too).
    block_rows = min(_MAX_BLOCK_ROWS, ((rows + 7) // 8) * 8)
    num_blocks = pl.cdiv(rows, block_rows)
    need_mask = (rows % block_rows) != 0

    kernel = functools.partial(
        _wmse_partial_kernel,
        weight_balance=bool(weight_balance),
        pos_weight=float(pos_weight),
        valid_rows=rows,
        block_rows=block_rows,
        need_mask=need_mask,
    )

    in_bytes = n_elems * (p2.dtype.itemsize + l2.dtype.itemsize)
    out_bytes = num_blocks * 8 * _LANES * 4
    cost = pl.CostEstimate(
        flops=6 * n_elems,
        transcendentals=n_elems,
        bytes_accessed=in_bytes + out_bytes,
    )

    partials = pl.pallas_call(
        kernel,
        out_shape=jax.ShapeDtypeStruct((num_blocks, 8, _LANES), jnp.float32),
        grid_spec=pltpu.PrefetchScalarGridSpec(
            num_scalar_prefetch=0,
            grid=(num_blocks,),
            in_specs=[
                pl.BlockSpec((block_rows, _LANES), lambda i: (i, 0)),
                pl.BlockSpec((block_rows, _LANES), lambda i: (i, 0)),
            ],
            # Leading block-index dim is squeezed -> kernel writes an (8,128) tile.
            out_specs=pl.BlockSpec((None, 8, _LANES), lambda i: (i, 0, 0)),
        ),
        compiler_params=pltpu.CompilerParams(
            dimension_semantics=("parallel",)),
        cost_estimate=cost,
    )(p2, l2)

    # Tiny final reduction + mean over the ORIGINAL element count.
    return (jnp.sum(partials) / jnp.float32(n_elems)).astype(jnp.float32)


def _reference(preds, labels, weight_balance=False, pos_weight=1.0):
    s = jax.nn.sigmoid(preds.astype(jnp.float32))
    loss = (s - labels.astype(jnp.float32)) ** 2
    if weight_balance:
        w = jnp.where(labels == 0.0, jnp.float32(pos_weight),
                      labels.astype(jnp.float32))
        loss = loss * w
    return jnp.mean(loss)


if __name__ == "__main__":
    key = jax.random.PRNGKey(0)
    k1, k2 = jax.random.split(key)

    # Small NCHW-style logits and binary labels (some exact zeros so the
    # weight_balance branch is exercised).
    B, C, H, W = 2, 4, 16, 16
    preds = jax.random.normal(k1, (B, C, H, W), dtype=jnp.float32)
    labels = (jax.random.uniform(k2, (B, C, H, W)) > 0.5).astype(jnp.float32)

    ok = True
    for wb, pw in [(False, 1.0), (True, 3.0)]:
        out = weighted_mse_loss(preds, labels, weight_balance=wb, pos_weight=pw)
        out = jax.block_until_ready(out)
        ref = _reference(preds, labels, weight_balance=wb, pos_weight=pw)
        if not jnp.allclose(out, ref, rtol=1e-5, atol=1e-6):
            ok = False

    if ok:
        print("KERNEL_OK")
</pallas_src>

<mosaic_0001>
module attributes {stable_mosaic.version = 11 : i64} {
  func.func @_wmse_partial_kernel(%arg0: i32, %arg1: memref<16x128xf32, #tpu.memory_space<vmem>>, %arg2: memref<16x128xf32, #tpu.memory_space<vmem>>, %arg3: memref<1x8x128xf32, #tpu.memory_space<vmem>>) attributes {dimension_semantics = [#tpu.dimension_semantics<parallel>], iteration_bounds = array<i64: 1>, scalar_prefetch = 0 : i64, scratch_operands = 0 : i64, tpu.core_type = #tpu.core_type<tc>, window_params = [{transform_indices = @transform_0, window_bounds = array<i64: 16, 128>}, {transform_indices = @transform_1, window_bounds = array<i64: 16, 128>}, {transform_indices = @transform_2, window_bounds = array<i64: 1, 8, 128>}]} {
    %c0 = arith.constant 0 : index
    %c0_0 = arith.constant 0 : index
    %0 = vector.load %arg1[%c0, %c0_0] : memref<16x128xf32, #tpu.memory_space<vmem>>, vector<16x128xf32>
    %c0_1 = arith.constant 0 : index
    %c0_2 = arith.constant 0 : index
    %1 = vector.load %arg2[%c0_1, %c0_2] : memref<16x128xf32, #tpu.memory_space<vmem>>, vector<16x128xf32>
    %cst = arith.constant 5.000000e-01 : f32
    %2 = vector.broadcast %cst : f32 to vector<16x128xf32>
    %3 = arith.mulf %2, %0 : vector<16x128xf32>
    %4 = math.tanh %3 : vector<16x128xf32>
    %cst_3 = arith.constant 1.000000e+00 : f32
    %5 = vector.broadcast %cst_3 : f32 to vector<16x128xf32>
    %6 = arith.addf %4, %5 : vector<16x128xf32>
    %cst_4 = arith.constant 5.000000e-01 : f32
    %7 = vector.broadcast %cst_4 : f32 to vector<16x128xf32>
    %8 = arith.mulf %7, %6 : vector<16x128xf32>
    %9 = arith.subf %8, %1 : vector<16x128xf32>
    %10 = arith.mulf %9, %9 : vector<16x128xf32>
    %11 = vector.shape_cast %10 : vector<16x128xf32> to vector<2x8x128xf32>
    %cst_5 = arith.constant dense<0.000000e+00> : vector<8x128xf32>
    %12 = vector.multi_reduction <add>, %11, %cst_5 [0] : vector<2x8x128xf32> to vector<8x128xf32>
    %c0_6 = arith.constant 0 : index
    %c0_7 = arith.constant 0 : index
    %c0_8 = arith.constant 0 : index
    %13 = vector.load %arg3[%c0_6, %c0_7, %c0_8] : memref<1x8x128xf32, #tpu.memory_space<vmem>>, vector<1x8x128xf32>
    %14 = vector.shape_cast %13 : vector<1x8x128xf32> to vector<8x128xf32>
    %15 = vector.shape_cast %12 : vector<8x128xf32> to vector<1x8x128xf32>
    tpu.vector_store %arg3[%c0_6, %c0_7, %c0_8], %15 {strides = array<i32>} : memref<1x8x128xf32, #tpu.memory_space<vmem>>, vector<1x8x128xf32>,
    return
  }
  func.func @transform_0(%arg0: i32) -> (i32, i32) {
    %c0_i32 = arith.constant 0 : i32
    %c0_i32_0 = arith.constant 0 : i32
    return %arg0, %c0_i32 : i32, i32
  }
  func.func @transform_1(%arg0: i32) -> (i32, i32) {
    %c0_i32 = arith.constant 0 : i32
    %c0_i32_0 = arith.constant 0 : i32
    return %arg0, %c0_i32 : i32, i32
  }
  func.func @transform_2(%arg0: i32) -> (i32, i32, i32) {
    %c0_i32 = arith.constant 0 : i32
    %c0_i32_0 = arith.constant 0 : i32
    %c0_i32_1 = arith.constant 0 : i32
    return %arg0, %c0_i32, %c0_i32_0 : i32, i32, i32
  }
}

</mosaic_0001>

<llo_original>
// kernel: tpu_custom_call.1
$region0: #{tpu_custom_call.1}
  #allocation0 [shape = 'u32[]', space=smem, size = 0x4, offset = 0x4, fixed_abs, tag = 'smem constant byte address 0x4 - core index']
  #allocation1 [shape = 'u32[72,128]{1,0:T(1,128)}', space=vmem, size = 0x9000, scoped, tag = 'internal scratch']
  %s0 = inlined_call_operand.hbm [shape: f32[16,128], index: 0, kind: input, shape index: {}]
  %s1 = inlined_call_operand.hbm [shape: f32[16,128], index: 1, kind: input, shape index: {}]
  %s2 = inlined_call_operand.hbm [shape: f32[1,8,128], index: 2, kind: output, shape index: {}]
  %s3 = sld [smem:[#allocation0]]
  $region26: #{tpu_custom_call.1} parent=0
    _
  %s5 = ssub.s32 1, %s3
  %s6 = scalar_select 0, %s5, %s3
  $region1: #{tpu_custom_call.1} parent=0
    #allocation2 [shape = 'u8[8192]{0}', space=vmem, size = 0x2000, scoped, tag = 'input window, operand 0, single buffered']
    #allocation3 [shape = 's32[1]{0}', space=sflag, size = 0x4, scoped, tag = 'scoped memory for tpu_custom_call.1']
    #allocation4 [shape = 's32[1]{0}', space=sflag, size = 0x4, scoped, tag = 'scoped memory for tpu_custom_call.1']
    #allocation5 [shape = 'u8[8192]{0}', space=vmem, size = 0x2000, scoped, tag = 'input window, operand 1, single buffered']
    #allocation6 [shape = 's32[1]{0}', space=sflag, size = 0x4, scoped, tag = 'scoped memory for tpu_custom_call.1']
    #allocation7 [shape = 'u8[4096]{0}', space=vmem, size = 0x1000, scoped, tag = 'output window, operand 0, single buffered']
    %7 = vsyncpa [#allocation3], 0
    %8 = vsyncpa [#allocation6], 0
    %9 = vsyncpa [#allocation4], 0
    // Predicated region
    $region2: #{tpu_custom_call.1} parent=1 // pred_check
      _
    $region3: #{tpu_custom_call.1} parent=1 // pred_check_branch
      %11 = sbr.rel (0) target = $region5
    $region4: #{tpu_custom_call.1} parent=1 // pred_region
      %13 = vsyncadd [#allocation3], 0
      %s14 = sshll.u32 %s0, 4
      %s15 = int_to_ptr.hbm [resolvable:$true] %s14
      %s16 = sshll.u32 [#allocation2], 4
      %s17 = int_to_ptr.vmem [resolvable:$true] %s16
      %22 = dma.hbm_to_vmem [thread:$0]  %s15, 256, %s17, [#allocation3], 128, 128, 8
    $region5: #{tpu_custom_call.1} parent=1 // pred_fallthru
      _
    // Predicated region
    $region6: #{tpu_custom_call.1} parent=1 // pred_check
      _
    $region7: #{tpu_custom_call.1} parent=1 // pred_check_branch
      %24 = sbr.rel (0) target = $region9
    $region8: #{tpu_custom_call.1} parent=1 // pred_region
      %26 = vsyncadd [#allocation6], 0
      %s27 = sshll.u32 %s1, 4
      %s28 = int_to_ptr.hbm [resolvable:$true] %s27
      %s29 = sshll.u32 [#allocation5], 4
      %s30 = int_to_ptr.vmem [resolvable:$true] %s29
      %35 = dma.hbm_to_vmem [thread:$0]  %s28, 256, %s30, [#allocation6], 128, 128, 8
    $region9: #{tpu_custom_call.1} parent=1 // pred_fallthru
      _
    // Predicated region
    $region10: #{tpu_custom_call.1} parent=1 // pred_check
      _
    $region11: #{tpu_custom_call.1} parent=1 // pred_check_branch
      %37 = sbr.rel (0) target = $region13
    $region12: #{tpu_custom_call.1} parent=1 // pred_region
      %39 = dma.done [#allocation3], 256
    $region13: #{tpu_custom_call.1} parent=1 // pred_fallthru
      _
    // Predicated region
    $region14: #{tpu_custom_call.1} parent=1 // pred_check
      _
    $region15: #{tpu_custom_call.1} parent=1 // pred_check_branch
      %41 = sbr.rel (0) target = $region17
    $region16: #{tpu_custom_call.1} parent=1 // pred_region
      %43 = dma.done [#allocation6], 256
    $region17: #{tpu_custom_call.1} parent=1 // pred_fallthru
      _
    %v44 = vld [vmem:[#allocation2] sm:$0xff]
    %v45 = vld [vmem:[#allocation2 + $0x8] sm:$0xff]
    %v46 = vld [vmem:[#allocation5] sm:$0xff]
    %v47 = vld [vmem:[#allocation5 + $0x8] sm:$0xff]
    %v48 = vmul.f32 %v44, 0.5
    %v49 = vmul.f32 %v45, 0.5
    %v50 = vtanh.pop %v48
    %v51 = vtanh.pop %v49
    %v52 = vadd.f32 %v50, 1.0
    %v53 = vadd.f32 %v51, 1.0
    %v54 = vmul.f32 %v52, 0.5
    %v55 = vmul.f32 %v53, 0.5
    %v56 = vsub.f32 %v54, %v46
    %v57 = vsub.f32 %v55, %v47
    %v58 = vmul.f32 %v56, %v56
    %v59 = vmul.f32 %v57, %v57
    %v60 = vadd.f32 %v58, %v59
    %61 = vst [vmem:[#allocation7] sm:$0xff] %v60
    // Predicated region
    $region18: #{tpu_custom_call.1} parent=1 // pred_check
      _
    $region19: #{tpu_custom_call.1} parent=1 // pred_check_branch
      %63 = sbr.rel (0) target = $region21
    $region20: #{tpu_custom_call.1} parent=1 // pred_region
      %65 = vsyncadd [#allocation4], 0
      %s67 = sshll.u32 [#allocation7], 4
      %s68 = int_to_ptr.vmem [resolvable:$true] %s67
      %s69 = sshll.u32 %s2, 4
      %s70 = int_to_ptr.hbm [resolvable:$true] %s69
      %72 = dma.vmem_to_hbm [thread:$0]  %s68, 128, %s70, [#allocation4]
    $region21: #{tpu_custom_call.1} parent=1 // pred_fallthru
      _
    // Predicated region
    $region22: #{tpu_custom_call.1} parent=1 // pred_check
      _
    $region23: #{tpu_custom_call.1} parent=1 // pred_check_branch
      %74 = sbr.rel (0) target = $region25
    $region24: #{tpu_custom_call.1} parent=1 // pred_region
      %76 = dma.done [#allocation4], 128
    $region25: #{tpu_custom_call.1} parent=1 // pred_fallthru
      _
    %77 = vsyncpa [#allocation3], 1
    %78 = vsyncpa [#allocation6], 1
    %79 = vsyncpa [#allocation4], 1

</llo_original>
